<compile_context>
chip_gen: v5e
topology: v5e:2x2
jax: 0.10.0
libtpu: 0.0.40
codegen_flags: <defaults>
</compile_context>

<pallas_src>
import functools

import jax
import jax.numpy as jnp
from jax.experimental import pallas as pl
from jax.experimental.pallas import tpu as pltpu


# ----------------------------------------------------------------------------
# Kernel
# ----------------------------------------------------------------------------
def _layernorm_kernel(*refs, eps, inv_h, has_residual):
    if has_residual:
        x_ref, r_ref, w_ref, b_ref, o_ref = refs
        # Fused residual add: free VALU filler on a mem-bound kernel.
        x = x_ref[...].astype(jnp.float32) + r_ref[...].astype(jnp.float32)
    else:
        x_ref, w_ref, b_ref, o_ref = refs
        x = x_ref[...].astype(jnp.float32)

    # One-pass statistics.  The hidden axis may be zero-padded to a multiple of
    # 128 lanes; padded columns are zero so plain sums divided by the *true*
    # hidden size (inv_h) are exact.  Two independent reductions co-issue on
    # the XLUs and overlap with VPU work.
    row_sum = jnp.sum(x, axis=-1, keepdims=True)
    row_sum_sq = jnp.sum(x * x, axis=-1, keepdims=True)
    mean = row_sum * inv_h
    mean_sq = row_sum_sq * inv_h
    var = jnp.maximum(mean_sq - mean * mean, 0.0)   # biased variance (matches torch)

    inv = jax.lax.rsqrt(var + eps)                  # EUP rsqrt (own VLIW slot)

    w = w_ref[...].astype(jnp.float32)              # (1, Hp), broadcast over rows
    b = b_ref[...].astype(jnp.float32)              # (1, Hp)

    # Padded weight/bias columns are zero, so padded output columns are zero
    # and get sliced off in the wrapper.
    o_ref[...] = ((x - mean) * inv * w + b).astype(o_ref.dtype)


# ----------------------------------------------------------------------------
# Tiling / per-generation tuning
# ----------------------------------------------------------------------------
def _round_up(x, m):
    return ((x + m - 1) // m) * m


def _vmem_capacity_bytes():
    try:
        return int(pltpu.get_tpu_info().vmem_capacity_bytes)
    except Exception:
        return 64 * 1024 * 1024  # conservative (v7x-sized) fallback


def _generation_tuning():
    """VMEM block budget / scoped limit / row cap per TPU generation."""
    vmem = _vmem_capacity_bytes()
    if vmem >= 100 * 1024 * 1024:
        # v5e / v6e: 128 MiB physical VMEM -> bigger blocks amortize the
        # ~0.35us/grid-step overhead; raise the scoped limit past the 16/32 MiB
        # defaults so the compiler does not shrink its internal tiling.
        return 6 << 20, 64 << 20, 4096
    # v7x: only 64 MiB VMEM per TensorCore -> keep per-block <= ~3-4 MiB and
    # the scoped limit <= 48 MiB (double-buffered in/out + f32 temporaries).
    return 3 << 20, 48 << 20, 2048


def _choose_row_tile(n_rows, hidden_padded, itemsize, block_budget, max_rows):
    """Pick a row tile that (a) amortizes per-grid-step overhead, (b) keeps
    double-buffered in/out blocks plus the in-kernel f32 working set inside the
    block budget, and (c) yields >= 2 (preferably even) grid steps so the
    'parallel' grid axis can shard rows across v7x's two TensorCores."""
    sub = max(8, 32 // max(1, itemsize))  # sublane packing: 8 f32 / 16 bf16 / 32 i8

    # Per-row VMEM cost: 2x double-buffered input + output blocks in the source
    # dtype, plus ~2 f32 temporaries (x in f32, x*x / centered x) that the
    # BlockSpec accounting does not track.
    per_row = hidden_padded * (4 * itemsize + 2 * 4)
    tm = block_budget // max(1, per_row)
    tm = max(sub, min(max_rows, tm))
    tm = (tm // sub) * sub

    if n_rows <= sub:
        return n_rows  # single block; block dim equals full array dim (legal)

    # Guarantee at least 2 grid steps for megacore sharding.
    tm = min(tm, _round_up(pl.cdiv(n_rows, 2), sub))
    steps = pl.cdiv(n_rows, tm)
    # Prefer an even number of steps for balanced 2-TensorCore load on v7x.
    if steps > 1 and steps % 2 == 1:
        tm_even = _round_up(pl.cdiv(n_rows, steps + 1), sub)
        if tm_even >= sub:
            tm = min(tm, tm_even)
    return max(sub, tm)


# ----------------------------------------------------------------------------
# Wrapper
# ----------------------------------------------------------------------------
def bert_layer_norm(x, weight, bias, eps=1e-12, residual=None):
    """LayerNorm over the last axis of x: (B, S, H); weight/bias: (H,).

    If `residual` (same shape as x) is given, computes LayerNorm(x + residual)
    with the add fused into the kernel (saves one full HBM round trip).
    """
    B, S, H = x.shape
    N = B * S
    itemsize = jnp.dtype(x.dtype).itemsize

    # Lane-dense hidden axis: pad H up to a multiple of 128 so output stores
    # are unmasked vst; statistics divide by the true H so padding is exact.
    Hp = H if H % 128 == 0 else _round_up(H, 128)

    x2 = x.reshape(N, H)
    row_inputs = [x2]
    if residual is not None:
        row_inputs.append(residual.reshape(N, H))
    w2 = weight.reshape(1, H)
    b2 = bias.reshape(1, H)

    if Hp != H:
        pad = ((0, 0), (0, Hp - H))
        row_inputs = [jnp.pad(a, pad) for a in row_inputs]
        w2 = jnp.pad(w2, pad)
        b2 = jnp.pad(b2, pad)

    block_budget, vmem_limit, max_rows = _generation_tuning()
    tm = _choose_row_tile(N, Hp, itemsize, block_budget, max_rows)
    grid = (pl.cdiv(N, tm),)

    row_spec = pl.BlockSpec((tm, Hp), lambda i: (i, 0))
    vec_spec = pl.BlockSpec((1, Hp), lambda i: (0, 0))
    in_specs = [row_spec] * len(row_inputs) + [vec_spec, vec_spec]

    n_row_streams = len(row_inputs) + 1  # reads of x (+ residual) + one write
    cost = pl.CostEstimate(
        flops=(8 if residual is not None else 7) * N * H,
        transcendentals=N,
        bytes_accessed=n_row_streams * N * H * itemsize + 2 * H * 4,
    )

    kernel = functools.partial(
        _layernorm_kernel, eps=eps, inv_h=1.0 / H,
        has_residual=residual is not None)

    out = pl.pallas_call(
        kernel,
        out_shape=jax.ShapeDtypeStruct((N, Hp), x.dtype),
        grid_spec=pltpu.PrefetchScalarGridSpec(
            num_scalar_prefetch=0,
            grid=grid,
            in_specs=in_specs,
            out_specs=row_spec,
        ),
        compiler_params=pltpu.CompilerParams(
            dimension_semantics=("parallel",),   # shard rows across TCs (v7x)
            vmem_limit_bytes=vmem_limit,
        ),
        cost_estimate=cost,
    )(*row_inputs, w2, b2)

    if Hp != H:
        out = out[:, :H]
    return out.reshape(B, S, H)


# ----------------------------------------------------------------------------
# Reference + test
# ----------------------------------------------------------------------------
def _reference(x, weight, bias, eps=1e-12):
    u = jnp.mean(x, axis=2, keepdims=True)
    s = jnp.mean((x - u) ** 2, axis=2, keepdims=True)
    y = (x - u) / jnp.sqrt(s + eps)
    return weight * y + bias


if __name__ == "__main__":
    B, S, H = 2, 8, 32
    key = jax.random.PRNGKey(0)
    kx, kr = jax.random.split(key)
    x = jax.random.normal(kx, (B, S, H), dtype=jnp.float32)

    # Deterministic parameter init matching nn.Parameter(ones)/(zeros).
    weight = jnp.ones((H,), dtype=jnp.float32)
    bias = jnp.zeros((H,), dtype=jnp.float32)

    # Plain LayerNorm path (matches the PyTorch module exactly).
    out = bert_layer_norm(x, weight, bias)
    out = jax.block_until_ready(out)
    ref = _reference(x, weight, bias)
    assert out.shape == (B, S, H)
    assert jnp.allclose(out, ref, atol=1e-5, rtol=1e-5)

    # Fused residual-add path: LayerNorm(x + r).
    r = jax.random.normal(kr, (B, S, H), dtype=jnp.float32)
    out_fused = jax.block_until_ready(bert_layer_norm(x, weight, bias, residual=r))
    ref_fused = _reference(x + r, weight, bias)
    assert jnp.allclose(out_fused, ref_fused, atol=1e-5, rtol=1e-5)

    print("KERNEL_OK")
</pallas_src>

<mosaic_0001>
module attributes {stable_mosaic.version = 11 : i64} {
  func.func @_layernorm_kernel(%arg0: i32, %arg1: memref<8x128xf32, #tpu.memory_space<vmem>>, %arg2: memref<1x128xf32, #tpu.memory_space<vmem>>, %arg3: memref<1x128xf32, #tpu.memory_space<vmem>>, %arg4: memref<8x128xf32, #tpu.memory_space<vmem>>) attributes {dimension_semantics = [#tpu.dimension_semantics<parallel>], iteration_bounds = array<i64: 2>, scalar_prefetch = 0 : i64, scratch_operands = 0 : i64, tpu.core_type = #tpu.core_type<tc>, window_params = [{transform_indices = @transform_0, window_bounds = array<i64: 8, 128>}, {pipeline_mode = #tpu.pipeline_mode<synchronous>, transform_indices = @transform_1, window_bounds = array<i64: 1, 128>}, {pipeline_mode = #tpu.pipeline_mode<synchronous>, transform_indices = @transform_2, window_bounds = array<i64: 1, 128>}, {transform_indices = @transform_3, window_bounds = array<i64: 8, 128>}]} {
    %c0 = arith.constant 0 : index
    %c0_0 = arith.constant 0 : index
    %0 = vector.load %arg1[%c0, %c0_0] : memref<8x128xf32, #tpu.memory_space<vmem>>, vector<8x128xf32>
    %cst = arith.constant dense<0.000000e+00> : vector<8xf32>
    %1 = vector.multi_reduction <add>, %0, %cst [1] : vector<8x128xf32> to vector<8xf32>
    %2 = vector.shape_cast %1 : vector<8xf32> to vector<8x1xf32>
    %3 = arith.mulf %0, %0 : vector<8x128xf32>
    %cst_1 = arith.constant dense<0.000000e+00> : vector<8xf32>
    %4 = vector.multi_reduction <add>, %3, %cst_1 [1] : vector<8x128xf32> to vector<8xf32>
    %5 = vector.shape_cast %4 : vector<8xf32> to vector<8x1xf32>
    %cst_2 = arith.constant 3.125000e-02 : f32
    %6 = vector.broadcast %cst_2 : f32 to vector<8x1xf32>
    %7 = arith.mulf %2, %6 : vector<8x1xf32>
    %cst_3 = arith.constant 3.125000e-02 : f32
    %8 = vector.broadcast %cst_3 : f32 to vector<8x1xf32>
    %9 = arith.mulf %5, %8 : vector<8x1xf32>
    %10 = arith.mulf %7, %7 : vector<8x1xf32>
    %11 = arith.subf %9, %10 : vector<8x1xf32>
    %cst_4 = arith.constant 0.000000e+00 : f32
    %12 = vector.broadcast %cst_4 : f32 to vector<8x1xf32>
    %13 = arith.maximumf %11, %12 : vector<8x1xf32>
    %cst_5 = arith.constant 9.99999996E-13 : f32
    %14 = vector.broadcast %cst_5 : f32 to vector<8x1xf32>
    %15 = arith.addf %13, %14 : vector<8x1xf32>
    %16 = math.rsqrt %15 : vector<8x1xf32>
    %c0_6 = arith.constant 0 : index
    %c0_7 = arith.constant 0 : index
    %17 = vector.load %arg2[%c0_6, %c0_7] : memref<1x128xf32, #tpu.memory_space<vmem>>, vector<1x128xf32>
    %c0_8 = arith.constant 0 : index
    %c0_9 = arith.constant 0 : index
    %18 = vector.load %arg3[%c0_8, %c0_9] : memref<1x128xf32, #tpu.memory_space<vmem>>, vector<1x128xf32>
    %19 = vector.broadcast %7 : vector<8x1xf32> to vector<8x128xf32>
    %20 = arith.subf %0, %19 : vector<8x128xf32>
    %21 = vector.broadcast %16 : vector<8x1xf32> to vector<8x128xf32>
    %22 = arith.mulf %20, %21 : vector<8x128xf32>
    %23 = vector.broadcast %17 : vector<1x128xf32> to vector<8x128xf32>
    %24 = arith.mulf %22, %23 : vector<8x128xf32>
    %25 = vector.broadcast %18 : vector<1x128xf32> to vector<8x128xf32>
    %26 = arith.addf %24, %25 : vector<8x128xf32>
    %c0_10 = arith.constant 0 : index
    %c0_11 = arith.constant 0 : index
    %27 = vector.load %arg4[%c0_10, %c0_11] : memref<8x128xf32, #tpu.memory_space<vmem>>, vector<8x128xf32>
    tpu.vector_store %arg4[%c0_10, %c0_11], %26 {strides = array<i32>} : memref<8x128xf32, #tpu.memory_space<vmem>>, vector<8x128xf32>,
    return
  }
  func.func @transform_0(%arg0: i32) -> (i32, i32) {
    %c0_i32 = arith.constant 0 : i32
    %c0_i32_0 = arith.constant 0 : i32
    return %arg0, %c0_i32 : i32, i32
  }
  func.func @transform_1(%arg0: i32) -> (i32, i32) {
    %c0_i32 = arith.constant 0 : i32
    %c0_i32_0 = arith.constant 0 : i32
    %c0_i32_1 = arith.constant 0 : i32
    return %c0_i32, %c0_i32_0 : i32, i32
  }
  func.func @transform_2(%arg0: i32) -> (i32, i32) {
    %c0_i32 = arith.constant 0 : i32
    %c0_i32_0 = arith.constant 0 : i32
    %c0_i32_1 = arith.constant 0 : i32
    return %c0_i32, %c0_i32_0 : i32, i32
  }
  func.func @transform_3(%arg0: i32) -> (i32, i32) {
    %c0_i32 = arith.constant 0 : i32
    %c0_i32_0 = arith.constant 0 : i32
    return %arg0, %c0_i32 : i32, i32
  }
}

</mosaic_0001>

<llo_original>
// kernel: tpu_custom_call.1
$region0: #{tpu_custom_call.1}
  #allocation0 [shape = 'u32[]', space=smem, size = 0x4, offset = 0x4, fixed_abs, tag = 'smem constant byte address 0x4 - core index']
  #allocation1 [shape = 'u32[72,128]{1,0:T(1,128)}', space=vmem, size = 0x9000, scoped, tag = 'internal scratch']
  %s0 = inlined_call_operand.hbm [shape: f32[16,128], index: 0, kind: input, shape index: {}]
  %s1 = inlined_call_operand.hbm [shape: f32[1,128], index: 1, kind: input, shape index: {}]
  %s2 = inlined_call_operand.vmem [shape: f32[1,128], index: 2, kind: input, shape index: {}]
  %s3 = inlined_call_operand.hbm [shape: f32[16,128], index: 3, kind: output, shape index: {}]
  %s4 = sld [smem:[#allocation0]]
  $region53: #{tpu_custom_call.1} parent=0
    _
  %s6 = ssub.s32 1, %s4
  %s7 = scalar_select 0, %s6, %s4
  $region1: #{tpu_custom_call.1} parent=0
    #allocation2 [shape = 'u8[8192]{0}', space=vmem, size = 0x2000, scoped, tag = 'input window, operand 0']
    #allocation3 [shape = 's32[2]{0}', space=sflag, size = 0x8, scoped, tag = 'scoped memory for tpu_custom_call.1']
    #allocation4 [shape = 's32[2]{0}', space=sflag, size = 0x8, scoped, tag = 'scoped memory for tpu_custom_call.1']
    #allocation5 [shape = 'u8[512]{0}', space=vmem, size = 0x400, scoped, tag = 'input window, operand 1, single buffered']
    #allocation6 [shape = 's32[1]{0}', space=sflag, size = 0x4, scoped, tag = 'scoped memory for tpu_custom_call.1']
    #allocation7 [shape = 'u8[8192]{0}', space=vmem, size = 0x2000, scoped, tag = 'output window, operand 0']
    %8 = vsyncpa [#allocation3], 0
    %s9 = scalar_lea.sflag [#allocation3], 1
    %10 = vsyncpa %s9, 0
    %11 = vsyncpa [#allocation6], 0
    %12 = vsyncpa [#allocation4], 0
    %s13 = scalar_lea.sflag [#allocation4], 1
    %14 = vsyncpa %s13, 0
    loop: start=0, step=1, limit=4
    $region2: #{tpu_custom_call.1} parent=1 // loop_pre_header
      _
    $region3: #{tpu_custom_call.1} parent=1 // loop_header
      %s16 = sphi 0, %s20
      %p17 = scmp.ge.s32.totalorder %s16, 4
      %s26 = sphi 0, %s28
      %s29 = sphi 0, %s26
      %s30 = sphi 0, %s29
      %s46 = sphi 0, %s30
      %s50 = sphi 0, %s50
      %s52 = sphi 0, %s50
      %s53 = sphi 0, %s52
      %s67 = sphi 0, %s53
      %s71 = sphi 0, %s71
      %s73 = sphi 0, %s71
      %s74 = sphi 0, %s73
      %s88 = sphi 0, %s74
      %s94 = sphi 0, %s96
      %s97 = sphi 0, %s94
      %s98 = sphi 0, %s97
      %s114 = sphi 0, %s98
    $region4: #{tpu_custom_call.1} parent=1 // loop_header_branch
      %19 = sbr.rel (%p17) target = $region8
    $region5: #{tpu_custom_call.1} parent=1 // loop_body
      %s21 = ssub.s32 %s16, 1
      %s22 = ssub.s32 %s16, 2
      %s23 = sadd.s32 %s16, 1
      %s24 = ssub.s32 %s16, %s23
      %p25 = scmp.eq.s32.totalorder %s24, 0
      %s27 = sadd.s32 %s26, 1
      %s28 = scalar_select %p25, %s26, %s27
      %p31 = pneg %p25
      %p32 = scmp.eq.s32.totalorder %s16, 1
      %p33 = por %p31, %p32
      %p34 = scmp.ne.s32.totalorder %s26, %s29
      %p35 = scmp.eq.s32.totalorder %s16, 0
      %p36 = por %p34, %p35
      %p37 = scmp.ne.s32.totalorder %s26, %s29
      %p38 = scmp.eq.s32.totalorder %s21, 1
      %p39 = por %p37, %p38
      %p40 = scmp.ne.s32.totalorder %s29, %s30
      %p41 = scmp.eq.s32.totalorder %s21, 0
      %p42 = por %p40, %p41
      %p43 = scmp.ne.s32.totalorder %s29, %s30
      %p44 = scmp.eq.s32.totalorder %s22, 1
      %p45 = por %p43, %p44
      %p47 = scmp.ne.s32.totalorder %s30, %s46
      %p48 = scmp.eq.s32.totalorder %s22, 0
      %p49 = por %p47, %p48
      %s51 = sadd.s32 %s50, 1
      %p54 = scmp.eq.s32.totalorder %s16, 1
      %p55 = scmp.ne.s32.totalorder %s50, %s52
      %p56 = scmp.eq.s32.totalorder %s16, 0
      %p57 = por %p55, %p56
      %p58 = scmp.ne.s32.totalorder %s50, %s52
      %p59 = scmp.eq.s32.totalorder %s21, 1
      %p60 = por %p58, %p59
      %p61 = scmp.ne.s32.totalorder %s52, %s53
      %p62 = scmp.eq.s32.totalorder %s21, 0
      %p63 = por %p61, %p62
      %p64 = scmp.ne.s32.totalorder %s52, %s53
      %p65 = scmp.eq.s32.totalorder %s22, 1
      %p66 = por %p64, %p65
      %p68 = scmp.ne.s32.totalorder %s53, %s67
      %p69 = scmp.eq.s32.totalorder %s22, 0
      %p70 = por %p68, %p69
      %s72 = sadd.s32 %s71, 1
      %p75 = scmp.eq.s32.totalorder %s16, 1
      %p76 = scmp.ne.s32.totalorder %s71, %s73
      %p77 = scmp.eq.s32.totalorder %s16, 0
      %p78 = por %p76, %p77
      %p79 = scmp.ne.s32.totalorder %s71, %s73
      %p80 = scmp.eq.s32.totalorder %s21, 1
      %p81 = por %p79, %p80
      %p82 = scmp.ne.s32.totalorder %s73, %s74
      %p83 = scmp.eq.s32.totalorder %s21, 0
      %p84 = por %p82, %p83
      %p85 = scmp.ne.s32.totalorder %s73, %s74
      %p86 = scmp.eq.s32.totalorder %s22, 1
      %p87 = por %p85, %p86
      %p89 = scmp.ne.s32.totalorder %s74, %s88
      %p90 = scmp.eq.s32.totalorder %s22, 0
      %p91 = por %p89, %p90
      %s92 = ssub.s32 %s16, %s23
      %p93 = scmp.eq.s32.totalorder %s92, 0
      %s95 = sadd.s32 %s94, 1
      %s96 = scalar_select %p93, %s94, %s95
      %p99 = pneg %p93
      %p100 = scmp.eq.s32.totalorder %s16, 1
      %p101 = por %p99, %p100
      %p102 = scmp.ne.s32.totalorder %s94, %s97
      %p103 = scmp.eq.s32.totalorder %s16, 0
      %p104 = por %p102, %p103
      %p105 = scmp.ne.s32.totalorder %s94, %s97
      %p106 = scmp.eq.s32.totalorder %s21, 1
      %p107 = por %p105, %p106
      %p108 = scmp.ne.s32.totalorder %s97, %s98
      %p109 = scmp.eq.s32.totalorder %s21, 0
      %p110 = por %p108, %p109
      %p111 = scmp.ne.s32.totalorder %s97, %s98
      %p112 = scmp.eq.s32.totalorder %s22, 1
      %p113 = por %p111, %p112
      %p115 = scmp.ne.s32.totalorder %s98, %s114
      %p116 = scmp.eq.s32.totalorder %s22, 0
      %p117 = por %p115, %p116
      %p118 = scmp.le.s32.totalorder 1, %s16
      %p119 = scmp.lt.s32.totalorder %s16, 3
      %p120 = pnand %p118, %p119
      %p121 = pneg %p120
      // Predicated region
      $region9: #{tpu_custom_call.1} parent=5 // pred_check
        _
      $region10: #{tpu_custom_call.1} parent=5 // pred_check_branch
        %123 = sbr.rel (%p120) target = $region12
      $region11: #{tpu_custom_call.1} parent=5 // pred_region
        %s124 = ssub.s32 %s16, 1
        // Predicated region
        $region13: #{tpu_custom_call.1} parent=11 // pred_check
          %p125 = pneg %p63
        $region14: #{tpu_custom_call.1} parent=11 // pred_check_branch
          %127 = sbr.rel (%p125) target = $region16
        $region15: #{tpu_custom_call.1} parent=11 // pred_region
          %129 = vsyncadd [#allocation6], 0
          %s131 = sshll.u32 %s1, 4
          %s132 = int_to_ptr.hbm [resolvable:$true] %s131
          %s133 = sshll.u32 [#allocation5], 4
          %s134 = int_to_ptr.vmem [resolvable:$true] %s133
          %136 = dma.hbm_to_vmem [thread:$0]  %s132, 16, %s134, [#allocation6]
        $region16: #{tpu_custom_call.1} parent=11 // pred_fallthru
          _
        // Predicated region
        $region17: #{tpu_custom_call.1} parent=11 // pred_check
          %p137 = pneg %p84
        $region18: #{tpu_custom_call.1} parent=11 // pred_check_branch
          %139 = sbr.rel (%p137) target = $region20
        $region19: #{tpu_custom_call.1} parent=11 // pred_region
          _
        $region20: #{tpu_custom_call.1} parent=11 // pred_fallthru
          _
      $region12: #{tpu_custom_call.1} parent=5 // pred_fallthru
        _
      %p140 = scmp.lt.s32.totalorder %s16, 2
      // Predicated region
      $region21: #{tpu_custom_call.1} parent=5 // pred_check
        %p141 = pneg %p140
      $region22: #{tpu_custom_call.1} parent=5 // pred_check_branch
        %143 = sbr.rel (%p141) target = $region24
      $region23: #{tpu_custom_call.1} parent=5 // pred_region
        // Predicated region
        $region25: #{tpu_custom_call.1} parent=23 // pred_check
          %p144 = pneg %p36
        $region26: #{tpu_custom_call.1} parent=23 // pred_check_branch
          %146 = sbr.rel (%p144) target = $region28
        $region27: #{tpu_custom_call.1} parent=23 // pred_region
          %s147 = sand.u32 %s26, 1
          %s148 = scalar_lea.sflag [#allocation3], %s147
          %s149 = sand.u32 %s26, 1
          %s150 = smul.addr %s149, 8
          %s151 = scalar_lea.vmem [#allocation2], %s150
          %153 = vsyncadd %s148, 0
          %s154 = smul.addr %s16, 8
          %s155 = scalar_lea.hbm %s0, %s154
          %s157 = sshll.u32 %s155, 4
          %s158 = int_to_ptr.hbm [resolvable:$true] %s157
          %s159 = sshll.u32 %s151, 4
          %s160 = int_to_ptr.vmem [resolvable:$true] %s159
          %162 = dma.hbm_to_vmem [thread:$0]  %s158, 128, %s160, %s148
        $region28: #{tpu_custom_call.1} parent=23 // pred_fallthru
          _
      $region24: #{tpu_custom_call.1} parent=5 // pred_fallthru
        _
      %p163 = scmp.le.s32.totalorder 1, %s16
      %p164 = scmp.lt.s32.totalorder %s16, 3
      %p165 = pnand %p163, %p164
      %p166 = pneg %p165
      // Predicated region
      $region29: #{tpu_custom_call.1} parent=5 // pred_check
        _
      $region30: #{tpu_custom_call.1} parent=5 // pred_check_branch
        %168 = sbr.rel (%p165) target = $region32
      $region31: #{tpu_custom_call.1} parent=5 // pred_region
        %s169 = ssub.s32 %s16, 1
        %s170 = sand.u32 %s29, 1
        %s171 = scalar_lea.sflag [#allocation3], %s170
        %s172 = sand.u32 %s29, 1
        %s173 = smul.addr %s172, 8
        %s174 = scalar_lea.vmem [#allocation2], %s173
        // Predicated region
        $region33: #{tpu_custom_call.1} parent=31 // pred_check
          %p175 = pneg %p42
        $region34: #{tpu_custom_call.1} parent=31 // pred_check_branch
          %177 = sbr.rel (%p175) target = $region36
        $region35: #{tpu_custom_call.1} parent=31 // pred_region
          %179 = dma.done %s171, 128
        $region36: #{tpu_custom_call.1} parent=31 // pred_fallthru
          _
        // Predicated region
        $region37: #{tpu_custom_call.1} parent=31 // pred_check
          %p180 = pneg %p63
        $region38: #{tpu_custom_call.1} parent=31 // pred_check_branch
          %182 = sbr.rel (%p180) target = $region40
        $region39: #{tpu_custom_call.1} parent=31 // pred_region
          %184 = dma.done [#allocation6], 16
        $region40: #{tpu_custom_call.1} parent=31 // pred_fallthru
          _
        %s185 = sand.u32 %s29, 1
        %s186 = scalar_lea.sflag [#allocation3], %s185
        %s187 = sand.u32 %s29, 1
        %s188 = smul.addr %s187, 8
        %s189 = scalar_lea.vmem [#allocation2], %s188
        %p190 = pneg %p42
        %p191 = pneg %p39
        %p192 = pneg %p63
        %p193 = pneg %p60
        %p194 = pneg %p84
        %p195 = pneg %p81
        %p196 = pneg %p110
        %p197 = pneg %p107
        %s198 = sand.u32 %s97, 1
        %s199 = scalar_lea.sflag [#allocation4], %s198
        %s200 = sand.u32 %s97, 1
        %s201 = smul.addr %s200, 8
        %s202 = scalar_lea.vmem [#allocation7], %s201
        %v203 = vld [vmem:[%s174] sm:$0xff]
        %204 = vadd.xlane.f32.xlu0 %v203
        %v205 = vpop.xlane.xlu0 %204
        %v206 = vmul.f32 %v203, %v203
        %207 = vadd.xlane.f32.xlu0 %v206
        %v208 = vpop.xlane.xlu0 %207
        %v209 = vmul.f32 %v205, 0.03125
        %v210 = vmul.f32 %v208, 0.03125
        %v211 = vmul.f32 %v209, %v209
        %v212 = vsub.f32 %v210, %v211
        %v213 = vmax.f32 %v212, 0.0
        %v214 = vadd.f32 %v213, 1e-12
        %v215 = vrsqrt.pop %v214
        %v216 = vmul.f32 %v215, %v214
        %v217 = vmul.f32 %v216, %v215
        %v218 = vmul.f32 0.5, %v217
        %v219 = vsub.f32 1.5, %v218
        %v220 = vmul.f32 %v215, %v219
        %vm221 = vweird.f32 %v214
        %vm222 = vweird.f32 %v215
        %vm223 = vmor %vm221, %vm222
        %v224 = vsel %vm223, %v215, %v220
        %v225 = vld [vmem:[#allocation5] sm:$0x1]
        %v226 = vld [vmem:[%s2] sm:$0x1]
        %v227 = vsub.f32 %v203, %v209
        %v228 = vmul.f32 %v227, %v224
        %v230 = vperm.slane %v225, 0
        %v232 = vmul.f32 %v228, %v230
        %v234 = vperm.slane %v226, 0
        %v236 = vadd.f32 %v232, %v234
        %237 = vst [vmem:[%s202] sm:$0xff] %v236
        %s238 = sand.u32 %s97, 1
        %s239 = scalar_lea.sflag [#allocation4], %s238
        %s240 = sand.u32 %s97, 1
        %s241 = smul.addr %s240, 8
        %s242 = scalar_lea.vmem [#allocation7], %s241
        // Predicated region
        $region41: #{tpu_custom_call.1} parent=31 // pred_check
          %p243 = pneg %p107
        $region42: #{tpu_custom_call.1} parent=31 // pred_check_branch
          %245 = sbr.rel (%p243) target = $region44
        $region43: #{tpu_custom_call.1} parent=31 // pred_region
          %247 = vsyncadd %s239, 0
          %s248 = smul.addr %s21, 8
          %s249 = scalar_lea.hbm %s3, %s248
          %s251 = sshll.u32 %s242, 4
          %s252 = int_to_ptr.vmem [resolvable:$true] %s251
          %s253 = sshll.u32 %s249, 4
          %s254 = int_to_ptr.hbm [resolvable:$true] %s253
          %256 = dma.vmem_to_hbm [thread:$0]  %s252, 128, %s254, %s239
        $region44: #{tpu_custom_call.1} parent=31 // pred_fallthru
          _
      $region32: #{tpu_custom_call.1} parent=5 // pred_fallthru
        _
      %p257 = scmp.le.s32.totalorder 2, %s16
      // Predicated region
      $region45: #{tpu_custom_call.1} parent=5 // pred_check
        %p258 = pneg %p257
      $region46: #{tpu_custom_call.1} parent=5 // pred_check_branch
        %260 = sbr.rel (%p258) target = $region48
      $region47: #{tpu_custom_call.1} parent=5 // pred_region
        %s261 = ssub.s32 %s16, 2
        // Predicated region
        $region49: #{tpu_custom_call.1} parent=47 // pred_check
          %p262 = pneg %p113
        $region50: #{tpu_custom_call.1} parent=47 // pred_check_branch
          %264 = sbr.rel (%p262) target = $region52
        $region51: #{tpu_custom_call.1} parent=47 // pred_region
          %s265 = sand.u32 %s98, 1
          %s266 = scalar_lea.sflag [#allocation4], %s265
          %s267 = sand.u32 %s98, 1
          %s268 = smul.addr %s267, 8
          %s269 = scalar_lea.vmem [#allocation7], %s268
          %271 = dma.done %s266, 128
        $region52: #{tpu_custom_call.1} parent=47 // pred_fallthru
          _
      $region48: #{tpu_custom_call.1} parent=5 // pred_fallthru
        _
    $region6: #{tpu_custom_call.1} parent=1 // loop_footer
      %s20 = sadd.s32 1, %s16
    $region7: #{tpu_custom_call.1} parent=1 // loop_footer_branch
      %15 = sbr.rel target = $region3
    $region8: #{tpu_custom_call.1} parent=1 // loop_exit
      _
    %272 = vsyncpa [#allocation3], 1
    %s273 = scalar_lea.sflag [#allocation3], 1
    %274 = vsyncpa %s273, 1
    %275 = vsyncpa [#allocation6], 1
    %276 = vsyncpa [#allocation4], 1
    %s277 = scalar_lea.sflag [#allocation4], 1
    %278 = vsyncpa %s277, 1

</llo_original>
